<compile_context>
chip_gen: v6e
topology: v6e:2x2x1
jax: 0.10.0
libtpu: 0.0.40
codegen_flags: <defaults>
</compile_context>

<pallas_src>
import functools

import jax
import jax.numpy as jnp
from jax.experimental import pallas as pl
from jax.experimental.pallas import tpu as pltpu


def _cdiv(a, b):
    return -(-a // b)


def _group_norm_kernel(x_ref, gamma_ref, beta_ref, o_ref, *, eps, inv_l, bessel):
    # x_ref / o_ref:       (1, tg, Cg_f, HW_f)  -- tg groups of one batch elem
    # gamma_ref/beta_ref:  (1, tg, Cg_f, 1)     -- compact per-row affine params
    #
    # Two-pass (numerically stable) stats in f32.  The input ref is re-read for
    # every pass so no full-block f32 temporary stays live across the kernel.

    # ---- pass 1: per-group mean --------------------------------------------
    x1 = x_ref[...].astype(jnp.float32)
    row_sum = jnp.sum(x1, axis=-1, keepdims=True)                   # (1,tg,Cg_f,1)
    mean = jnp.sum(row_sum, axis=-2, keepdims=True) * jnp.float32(inv_l)  # (1,tg,1,1)

    # ---- pass 2: per-group UNBIASED variance (divide by L-1, torch.var default)
    diff = x_ref[...].astype(jnp.float32) - mean                    # re-read ref
    sq_row = jnp.sum(diff * diff, axis=-1, keepdims=True)           # (1,tg,Cg_f,1)
    var = jnp.sum(sq_row, axis=-2, keepdims=True) * jnp.float32(bessel)   # (1,tg,1,1)
    inv_std = jax.lax.rsqrt(var + jnp.float32(eps))

    # Fold affine into per-(group, folded-channel) scale/shift -> 1 FMA / elem.
    scale = gamma_ref[...].astype(jnp.float32) * inv_std            # (1,tg,Cg_f,1)
    shift = beta_ref[...].astype(jnp.float32) - mean * scale        # (1,tg,Cg_f,1)

    # ---- pass 3: normalize + store (re-read again; data is already in VMEM) -
    o_ref[...] = (x_ref[...].astype(jnp.float32) * scale + shift).astype(o_ref.dtype)


def _choose_fold(Cg, HW, itemsize):
    """Pick s so each group's (Cg, HW) view becomes (Cg*s, HW//s) with a lane
    dim that is a multiple of 128 and minimal sublane padding."""
    sub = {4: 8, 2: 16, 1: 32}.get(int(itemsize), 8)
    best_s, best_key = 1, None
    for s in range(1, HW + 1):
        if HW % s:
            continue
        lanes = HW // s
        if lanes % 128:
            continue
        rows = Cg * s
        util = rows / (_cdiv(rows, sub) * sub)   # fraction of vreg sublanes used
        key = (util, -s)                          # max utilization, then smaller s
        if best_key is None or key > best_key:
            best_s, best_key = s, key
    return best_s


def _vmem_capacity_bytes():
    try:
        cap = getattr(pltpu.get_tpu_info(), "vmem_capacity_bytes", None)
        if cap:
            return int(cap)
    except Exception:
        pass
    return 64 << 20  # conservative default (v7x per-TensorCore VMEM)


def group_norm_pallas(x, gamma, beta, num_groups, eps=1e-5, target_block_bytes=None):
    """GroupNorm forward matching the PyTorch reference module.

    x: (N, C, H, W);  gamma, beta: (C,)
    """
    N, C, H, W = x.shape
    G = num_groups
    assert C % G == 0, "num_channels must be divisible by num_groups"
    Cg = C // G
    HW = H * W
    L = Cg * HW
    itemsize = x.dtype.itemsize

    vmem_cap = _vmem_capacity_bytes()
    if target_block_bytes is None:
        # ~4 MiB blocks on big-VMEM chips (v5e/v6e), scaled down on v7x (64 MiB/TC).
        target_block_bytes = min(4 << 20, vmem_cap // 16)

    # ---- dense (sublane, lane) folding of each group's data -----------------
    s = _choose_fold(Cg, HW, itemsize)
    Cg_f, HW_f = Cg * s, HW // s
    x_g = x.reshape(N, G, Cg_f, HW_f)
    gamma_g = jnp.repeat(gamma.reshape(1, G, Cg, 1), s, axis=2)   # (1, G, Cg_f, 1)
    beta_g = jnp.repeat(beta.reshape(1, G, Cg, 1), s, axis=2)

    # ---- group-axis tiling (no divisor requirement on G) --------------------
    bytes_per_group = Cg_f * HW_f * itemsize
    tg = int(max(1, min(G, target_block_bytes // max(bytes_per_group, 1))))
    # Keep >= 8 grid steps for megacore sharding + pipelining, but never shrink
    # blocks below ~256 KiB just to manufacture steps.
    while tg > 1 and N * _cdiv(G, tg) < 8 and (tg // 2) * bytes_per_group >= (256 << 10):
        tg //= 2
    n_gtiles = _cdiv(G, tg)
    # TODO(synk): when a single group exceeds the VMEM budget
    # (bytes_per_group > target_block_bytes), chunk HW inside the kernel via an
    # extra 'arbitrary' grid axis with sum/sumsq accumulators instead of taking
    # one oversized block.

    block_bytes = tg * bytes_per_group
    f32_block_bytes = tg * Cg_f * HW_f * 4
    # double-buffered in + out blocks, transient f32 temps, params + headroom
    need = 4 * block_bytes + 3 * f32_block_bytes + (1 << 20)
    vmem_limit = int(min(vmem_cap * 3 // 4, max(2 * need, 48 << 20)))

    kernel = functools.partial(
        _group_norm_kernel,
        eps=float(eps),
        inv_l=1.0 / L,
        bessel=1.0 / max(L - 1, 1),
    )

    out_g = pl.pallas_call(
        kernel,
        out_shape=jax.ShapeDtypeStruct((N, G, Cg_f, HW_f), x.dtype),
        grid_spec=pltpu.PrefetchScalarGridSpec(
            num_scalar_prefetch=0,
            # N is the inner (fastest) axis so gamma/beta block indices do not
            # change across it -> their tiny DMAs are not re-issued every step.
            grid=(n_gtiles, N),
            in_specs=[
                pl.BlockSpec((1, tg, Cg_f, HW_f), lambda g, n: (n, g, 0, 0)),
                pl.BlockSpec((1, tg, Cg_f, 1), lambda g, n: (0, g, 0, 0)),
                pl.BlockSpec((1, tg, Cg_f, 1), lambda g, n: (0, g, 0, 0)),
            ],
            out_specs=pl.BlockSpec((1, tg, Cg_f, HW_f), lambda g, n: (n, g, 0, 0)),
        ),
        compiler_params=pltpu.CompilerParams(
            dimension_semantics=("parallel", "parallel"),
            vmem_limit_bytes=vmem_limit,
        ),
    )(x_g, gamma_g, beta_g)

    return out_g.reshape(N, C, H, W)


def group_norm_ref(x, gamma, beta, num_groups, eps=1e-5):
    # Pure-JAX reference mirroring the PyTorch module (unbiased variance).
    N, C, H, W = x.shape
    G = num_groups
    xg = x.reshape(N, G, -1).astype(jnp.float32)
    L = xg.shape[-1]
    mean = jnp.mean(xg, axis=-1, keepdims=True)
    var = jnp.sum((xg - mean) ** 2, axis=-1, keepdims=True) / (L - 1)
    xn = (xg - mean) / jnp.sqrt(var + eps)
    xn = xn.reshape(N, C, H, W)
    out = gamma.reshape(1, C, 1, 1) * xn + beta.reshape(1, C, 1, 1)
    return out.astype(x.dtype)


if __name__ == "__main__":
    # Small deterministic config consistent with the module (C % G == 0).
    N, C, H, W = 2, 8, 16, 16
    G = 4
    eps = 1e-5

    key = jax.random.PRNGKey(0)
    x = jax.random.normal(key, (N, C, H, W), dtype=jnp.float32)

    # Parameters initialized exactly as the module's __init__: ones / zeros.
    gamma = jnp.ones((C,), dtype=jnp.float32)
    beta = jnp.zeros((C,), dtype=jnp.float32)

    out = group_norm_pallas(x, gamma, beta, num_groups=G, eps=eps)
    out = jax.block_until_ready(out)

    ref = group_norm_ref(x, gamma, beta, num_groups=G, eps=eps)
    assert out.shape == (N, C, H, W)
    assert jnp.allclose(out, ref, atol=1e-5, rtol=1e-5), "mismatch vs reference"

    print("KERNEL_OK")
</pallas_src>

<mosaic_0001>
module attributes {stable_mosaic.version = 11 : i64} {
  func.func @_group_norm_kernel(%arg0: i32, %arg1: i32, %arg2: memref<1x4x4x128xf32, #tpu.memory_space<vmem>>, %arg3: memref<1x4x4x1xf32, #tpu.memory_space<vmem>>, %arg4: memref<1x4x4x1xf32, #tpu.memory_space<vmem>>, %arg5: memref<1x4x4x128xf32, #tpu.memory_space<vmem>>) attributes {dimension_semantics = [#tpu.dimension_semantics<parallel>, #tpu.dimension_semantics<parallel>], iteration_bounds = array<i64: 1, 2>, scalar_prefetch = 0 : i64, scratch_operands = 0 : i64, tpu.core_type = #tpu.core_type<tc>, window_params = [{transform_indices = @transform_0, window_bounds = array<i64: 1, 4, 4, 128>}, {transform_indices = @transform_1, window_bounds = array<i64: 1, 4, 4, 1>}, {transform_indices = @transform_2, window_bounds = array<i64: 1, 4, 4, 1>}, {transform_indices = @transform_3, window_bounds = array<i64: 1, 4, 4, 128>}]} {
    %c0 = arith.constant 0 : index
    %c0_0 = arith.constant 0 : index
    %c0_1 = arith.constant 0 : index
    %c0_2 = arith.constant 0 : index
    %0 = vector.load %arg2[%c0, %c0_0, %c0_1, %c0_2] : memref<1x4x4x128xf32, #tpu.memory_space<vmem>>, vector<1x4x4x128xf32>
    %cst = arith.constant dense<0.000000e+00> : vector<1x4x4xf32>
    %1 = vector.multi_reduction <add>, %0, %cst [3] : vector<1x4x4x128xf32> to vector<1x4x4xf32>
    %2 = vector.shape_cast %1 : vector<1x4x4xf32> to vector<1x4x4x1xf32>
    %cst_3 = arith.constant dense<0.000000e+00> : vector<1x4x1xf32>
    %3 = vector.multi_reduction <add>, %2, %cst_3 [2] : vector<1x4x4x1xf32> to vector<1x4x1xf32>
    %4 = vector.shape_cast %3 : vector<1x4x1xf32> to vector<1x4x1x1xf32>
    %cst_4 = arith.constant 0.001953125 : f32
    %5 = vector.broadcast %cst_4 : f32 to vector<1x4x1x1xf32>
    %6 = arith.mulf %4, %5 : vector<1x4x1x1xf32>
    %c0_5 = arith.constant 0 : index
    %c0_6 = arith.constant 0 : index
    %c0_7 = arith.constant 0 : index
    %c0_8 = arith.constant 0 : index
    %7 = vector.load %arg2[%c0_5, %c0_6, %c0_7, %c0_8] : memref<1x4x4x128xf32, #tpu.memory_space<vmem>>, vector<1x4x4x128xf32>
    %8 = vector.broadcast %6 : vector<1x4x1x1xf32> to vector<1x4x4x128xf32>
    %9 = arith.subf %7, %8 : vector<1x4x4x128xf32>
    %10 = arith.mulf %9, %9 : vector<1x4x4x128xf32>
    %cst_9 = arith.constant dense<0.000000e+00> : vector<1x4x4xf32>
    %11 = vector.multi_reduction <add>, %10, %cst_9 [3] : vector<1x4x4x128xf32> to vector<1x4x4xf32>
    %12 = vector.shape_cast %11 : vector<1x4x4xf32> to vector<1x4x4x1xf32>
    %cst_10 = arith.constant dense<0.000000e+00> : vector<1x4x1xf32>
    %13 = vector.multi_reduction <add>, %12, %cst_10 [2] : vector<1x4x4x1xf32> to vector<1x4x1xf32>
    %14 = vector.shape_cast %13 : vector<1x4x1xf32> to vector<1x4x1x1xf32>
    %cst_11 = arith.constant 0.00195694715 : f32
    %15 = vector.broadcast %cst_11 : f32 to vector<1x4x1x1xf32>
    %16 = arith.mulf %14, %15 : vector<1x4x1x1xf32>
    %cst_12 = arith.constant 9.99999974E-6 : f32
    %17 = vector.broadcast %cst_12 : f32 to vector<1x4x1x1xf32>
    %18 = arith.addf %16, %17 : vector<1x4x1x1xf32>
    %19 = math.rsqrt %18 : vector<1x4x1x1xf32>
    %c0_13 = arith.constant 0 : index
    %c0_14 = arith.constant 0 : index
    %c0_15 = arith.constant 0 : index
    %c0_16 = arith.constant 0 : index
    %20 = vector.load %arg3[%c0_13, %c0_14, %c0_15, %c0_16] : memref<1x4x4x1xf32, #tpu.memory_space<vmem>>, vector<1x4x4x1xf32>
    %21 = vector.broadcast %19 : vector<1x4x1x1xf32> to vector<1x4x4x1xf32>
    %22 = arith.mulf %20, %21 : vector<1x4x4x1xf32>
    %c0_17 = arith.constant 0 : index
    %c0_18 = arith.constant 0 : index
    %c0_19 = arith.constant 0 : index
    %c0_20 = arith.constant 0 : index
    %23 = vector.load %arg4[%c0_17, %c0_18, %c0_19, %c0_20] : memref<1x4x4x1xf32, #tpu.memory_space<vmem>>, vector<1x4x4x1xf32>
    %24 = vector.broadcast %6 : vector<1x4x1x1xf32> to vector<1x4x4x1xf32>
    %25 = arith.mulf %24, %22 : vector<1x4x4x1xf32>
    %26 = arith.subf %23, %25 : vector<1x4x4x1xf32>
    %c0_21 = arith.constant 0 : index
    %c0_22 = arith.constant 0 : index
    %c0_23 = arith.constant 0 : index
    %c0_24 = arith.constant 0 : index
    %27 = vector.load %arg2[%c0_21, %c0_22, %c0_23, %c0_24] : memref<1x4x4x128xf32, #tpu.memory_space<vmem>>, vector<1x4x4x128xf32>
    %28 = vector.broadcast %22 : vector<1x4x4x1xf32> to vector<1x4x4x128xf32>
    %29 = arith.mulf %27, %28 : vector<1x4x4x128xf32>
    %30 = vector.broadcast %26 : vector<1x4x4x1xf32> to vector<1x4x4x128xf32>
    %31 = arith.addf %29, %30 : vector<1x4x4x128xf32>
    %c0_25 = arith.constant 0 : index
    %c0_26 = arith.constant 0 : index
    %c0_27 = arith.constant 0 : index
    %c0_28 = arith.constant 0 : index
    %32 = vector.load %arg5[%c0_25, %c0_26, %c0_27, %c0_28] : memref<1x4x4x128xf32, #tpu.memory_space<vmem>>, vector<1x4x4x128xf32>
    tpu.vector_store %arg5[%c0_25, %c0_26, %c0_27, %c0_28], %31 {strides = array<i32>} : memref<1x4x4x128xf32, #tpu.memory_space<vmem>>, vector<1x4x4x128xf32>,
    return
  }
  func.func @transform_0(%arg0: i32, %arg1: i32) -> (i32, i32, i32, i32) {
    %c0_i32 = arith.constant 0 : i32
    %c0_i32_0 = arith.constant 0 : i32
    %c0_i32_1 = arith.constant 0 : i32
    return %arg1, %arg0, %c0_i32, %c0_i32_0 : i32, i32, i32, i32
  }
  func.func @transform_1(%arg0: i32, %arg1: i32) -> (i32, i32, i32, i32) {
    %c0_i32 = arith.constant 0 : i32
    %c0_i32_0 = arith.constant 0 : i32
    %c0_i32_1 = arith.constant 0 : i32
    %c0_i32_2 = arith.constant 0 : i32
    return %c0_i32, %arg0, %c0_i32_0, %c0_i32_1 : i32, i32, i32, i32
  }
  func.func @transform_2(%arg0: i32, %arg1: i32) -> (i32, i32, i32, i32) {
    %c0_i32 = arith.constant 0 : i32
    %c0_i32_0 = arith.constant 0 : i32
    %c0_i32_1 = arith.constant 0 : i32
    %c0_i32_2 = arith.constant 0 : i32
    return %c0_i32, %arg0, %c0_i32_0, %c0_i32_1 : i32, i32, i32, i32
  }
  func.func @transform_3(%arg0: i32, %arg1: i32) -> (i32, i32, i32, i32) {
    %c0_i32 = arith.constant 0 : i32
    %c0_i32_0 = arith.constant 0 : i32
    %c0_i32_1 = arith.constant 0 : i32
    return %arg1, %arg0, %c0_i32, %c0_i32_0 : i32, i32, i32, i32
  }
}

</mosaic_0001>

<llo_original>
// kernel: tpu_custom_call.1
$region0: #{tpu_custom_call.1}
  #allocation0 [shape = 'u32[]', space=smem, size = 0x4, offset = 0x4, fixed_abs, tag = 'smem constant byte address 0x4 - core index']
  #allocation1 [shape = 'u32[144,128]{1,0:T(1,128)}', space=vmem, size = 0x12000, scoped, tag = 'internal scratch']
  %s0 = inlined_call_operand.vmem [shape: f32[2,4,4,128], index: 0, kind: input, shape index: {}]
  %s1 = inlined_call_operand.vmem [shape: f32[1,4,4,1], index: 1, kind: input, shape index: {}]
  %s2 = inlined_call_operand.vmem [shape: f32[1,4,4,1], index: 2, kind: input, shape index: {}]
  %s3 = inlined_call_operand.hbm [shape: f32[2,4,4,128], index: 3, kind: output, shape index: {}]
  %s4 = sld [smem:[#allocation0]]
  $region45: #{tpu_custom_call.1} parent=0
    _
  %s6 = ssub.s32 1, %s4
  %s7 = scalar_select 0, %s6, %s4
  $region1: #{tpu_custom_call.1} parent=0
    #allocation2 [shape = 'u8[16384]{0}', space=vmem, size = 0x4000, scoped, tag = 'output window, operand 0']
    #allocation3 [shape = 's32[2]{0}', space=sflag, size = 0x8, scoped, tag = 'scoped memory for tpu_custom_call.1']
    %8 = vsyncpa [#allocation3], 0
    %s9 = scalar_lea.sflag [#allocation3], 1
    %10 = vsyncpa %s9, 0
    loop: start=0, step=1, limit=4
    $region2: #{tpu_custom_call.1} parent=1 // loop_pre_header
      _
    $region3: #{tpu_custom_call.1} parent=1 // loop_header
      %s12 = sphi 0, %s16
      %p13 = scmp.ge.s32.totalorder %s12, 4
      %s19 = sphi 0, %s31
      %s20 = sphi 0, %s27
      %s21 = sphi 0, %s19
      %s22 = sphi 0, %s20
      %s23 = sphi 0, %s21
      %s24 = sphi 0, %s22
      %s36 = sphi 0, %s38
      %s39 = sphi 0, %s36
      %s40 = sphi 0, %s39
      %s56 = sphi 0, %s40
      %s62 = sphi 0, %s64
      %s65 = sphi 0, %s62
      %s66 = sphi 0, %s65
      %s82 = sphi 0, %s66
      %s88 = sphi 0, %s90
      %s91 = sphi 0, %s88
      %s92 = sphi 0, %s91
      %s108 = sphi 0, %s92
      %s116 = sphi 0, %s118
      %s119 = sphi 0, %s116
      %s120 = sphi 0, %s119
      %s136 = sphi 0, %s120
    $region4: #{tpu_custom_call.1} parent=1 // loop_header_branch
      %15 = sbr.rel (%p13) target = $region8
    $region5: #{tpu_custom_call.1} parent=1 // loop_body
      %s17 = ssub.s32 %s12, 1
      %s18 = ssub.s32 %s12, 2
      %s25 = sadd.s32 1, %s20
      %p26 = scmp.ge.s32.totalorder %s25, 2
      %s27 = scalar_select %p26, 0, %s25
      %s28 = sadd.s32 1, %s19
      %s29 = scalar_select %p26, %s28, %s19
      %p30 = scmp.ge.s32.totalorder %s29, 1
      %s31 = scalar_select %p30, 0, %s29
      %s32 = ssub.s32 %s20, %s27
      %s33 = ssub.s32 %s19, %s31
      %s34 = sor.u32 %s32, %s33
      %p35 = scmp.eq.s32.totalorder %s34, 0
      %s37 = sadd.s32 %s36, 1
      %s38 = scalar_select %p35, %s36, %s37
      %p41 = pneg %p35
      %p42 = scmp.eq.s32.totalorder %s12, 1
      %p43 = por %p41, %p42
      %p44 = scmp.ne.s32.totalorder %s36, %s39
      %p45 = scmp.eq.s32.totalorder %s12, 0
      %p46 = por %p44, %p45
      %p47 = scmp.ne.s32.totalorder %s36, %s39
      %p48 = scmp.eq.s32.totalorder %s17, 1
      %p49 = por %p47, %p48
      %p50 = scmp.ne.s32.totalorder %s39, %s40
      %p51 = scmp.eq.s32.totalorder %s17, 0
      %p52 = por %p50, %p51
      %p53 = scmp.ne.s32.totalorder %s39, %s40
      %p54 = scmp.eq.s32.totalorder %s18, 1
      %p55 = por %p53, %p54
      %p57 = scmp.ne.s32.totalorder %s40, %s56
      %p58 = scmp.eq.s32.totalorder %s18, 0
      %p59 = por %p57, %p58
      %s60 = ssub.s32 %s19, %s31
      %p61 = scmp.eq.s32.totalorder %s60, 0
      %s63 = sadd.s32 %s62, 1
      %s64 = scalar_select %p61, %s62, %s63
      %p67 = pneg %p61
      %p68 = scmp.eq.s32.totalorder %s12, 1
      %p69 = por %p67, %p68
      %p70 = scmp.ne.s32.totalorder %s62, %s65
      %p71 = scmp.eq.s32.totalorder %s12, 0
      %p72 = por %p70, %p71
      %p73 = scmp.ne.s32.totalorder %s62, %s65
      %p74 = scmp.eq.s32.totalorder %s17, 1
      %p75 = por %p73, %p74
      %p76 = scmp.ne.s32.totalorder %s65, %s66
      %p77 = scmp.eq.s32.totalorder %s17, 0
      %p78 = por %p76, %p77
      %p79 = scmp.ne.s32.totalorder %s65, %s66
      %p80 = scmp.eq.s32.totalorder %s18, 1
      %p81 = por %p79, %p80
      %p83 = scmp.ne.s32.totalorder %s66, %s82
      %p84 = scmp.eq.s32.totalorder %s18, 0
      %p85 = por %p83, %p84
      %s86 = ssub.s32 %s19, %s31
      %p87 = scmp.eq.s32.totalorder %s86, 0
      %s89 = sadd.s32 %s88, 1
      %s90 = scalar_select %p87, %s88, %s89
      %p93 = pneg %p87
      %p94 = scmp.eq.s32.totalorder %s12, 1
      %p95 = por %p93, %p94
      %p96 = scmp.ne.s32.totalorder %s88, %s91
      %p97 = scmp.eq.s32.totalorder %s12, 0
      %p98 = por %p96, %p97
      %p99 = scmp.ne.s32.totalorder %s88, %s91
      %p100 = scmp.eq.s32.totalorder %s17, 1
      %p101 = por %p99, %p100
      %p102 = scmp.ne.s32.totalorder %s91, %s92
      %p103 = scmp.eq.s32.totalorder %s17, 0
      %p104 = por %p102, %p103
      %p105 = scmp.ne.s32.totalorder %s91, %s92
      %p106 = scmp.eq.s32.totalorder %s18, 1
      %p107 = por %p105, %p106
      %p109 = scmp.ne.s32.totalorder %s92, %s108
      %p110 = scmp.eq.s32.totalorder %s18, 0
      %p111 = por %p109, %p110
      %s112 = ssub.s32 %s20, %s27
      %s113 = ssub.s32 %s19, %s31
      %s114 = sor.u32 %s112, %s113
      %p115 = scmp.eq.s32.totalorder %s114, 0
      %s117 = sadd.s32 %s116, 1
      %s118 = scalar_select %p115, %s116, %s117
      %p121 = pneg %p115
      %p122 = scmp.eq.s32.totalorder %s12, 1
      %p123 = por %p121, %p122
      %p124 = scmp.ne.s32.totalorder %s116, %s119
      %p125 = scmp.eq.s32.totalorder %s12, 0
      %p126 = por %p124, %p125
      %p127 = scmp.ne.s32.totalorder %s116, %s119
      %p128 = scmp.eq.s32.totalorder %s17, 1
      %p129 = por %p127, %p128
      %p130 = scmp.ne.s32.totalorder %s119, %s120
      %p131 = scmp.eq.s32.totalorder %s17, 0
      %p132 = por %p130, %p131
      %p133 = scmp.ne.s32.totalorder %s119, %s120
      %p134 = scmp.eq.s32.totalorder %s18, 1
      %p135 = por %p133, %p134
      %p137 = scmp.ne.s32.totalorder %s120, %s136
      %p138 = scmp.eq.s32.totalorder %s18, 0
      %p139 = por %p137, %p138
      %p140 = scmp.le.s32.totalorder 1, %s12
      %p141 = scmp.lt.s32.totalorder %s12, 3
      %p142 = pnand %p140, %p141
      %p143 = pneg %p142
      // Predicated region
      $region9: #{tpu_custom_call.1} parent=5 // pred_check
        _
      $region10: #{tpu_custom_call.1} parent=5 // pred_check_branch
        %145 = sbr.rel (%p142) target = $region12
      $region11: #{tpu_custom_call.1} parent=5 // pred_region
        %s146 = ssub.s32 %s12, 1
        // Predicated region
        $region13: #{tpu_custom_call.1} parent=11 // pred_check
          %p147 = pneg %p78
        $region14: #{tpu_custom_call.1} parent=11 // pred_check_branch
          %149 = sbr.rel (%p147) target = $region16
        $region15: #{tpu_custom_call.1} parent=11 // pred_region
          %s150 = smul.u32 4, %s21
          %p151 = scmp.lt.s32.totalorder %s150, 3
          %s152 = scalar_select %p151, %s150, 3
          %s153 = smul.addr %s152, 4
          %s154 = scalar_lea.vmem %s1, %s153
          %s155 = smul.u32 4, %s21
        $region16: #{tpu_custom_call.1} parent=11 // pred_fallthru
          _
        // Predicated region
        $region17: #{tpu_custom_call.1} parent=11 // pred_check
          %p156 = pneg %p104
        $region18: #{tpu_custom_call.1} parent=11 // pred_check_branch
          %158 = sbr.rel (%p156) target = $region20
        $region19: #{tpu_custom_call.1} parent=11 // pred_region
          %s159 = smul.u32 4, %s21
          %p160 = scmp.lt.s32.totalorder %s159, 3
          %s161 = scalar_select %p160, %s159, 3
          %s162 = smul.addr %s161, 4
          %s163 = scalar_lea.vmem %s2, %s162
          %s164 = smul.u32 4, %s21
        $region20: #{tpu_custom_call.1} parent=11 // pred_fallthru
          _
      $region12: #{tpu_custom_call.1} parent=5 // pred_fallthru
        _
      %p165 = scmp.lt.s32.totalorder %s12, 2
      // Predicated region
      $region21: #{tpu_custom_call.1} parent=5 // pred_check
        %p166 = pneg %p165
      $region22: #{tpu_custom_call.1} parent=5 // pred_check_branch
        %168 = sbr.rel (%p166) target = $region24
      $region23: #{tpu_custom_call.1} parent=5 // pred_region
        // Predicated region
        $region25: #{tpu_custom_call.1} parent=23 // pred_check
          %p169 = pneg %p46
        $region26: #{tpu_custom_call.1} parent=23 // pred_check_branch
          %171 = sbr.rel (%p169) target = $region28
        $region27: #{tpu_custom_call.1} parent=23 // pred_region
          %s172 = smul.u32 4, %s19
          %p173 = scmp.lt.s32.totalorder %s20, 1
          %s174 = scalar_select %p173, %s20, 1
          %p175 = scmp.lt.s32.totalorder %s172, 3
          %s176 = scalar_select %p175, %s172, 3
          %s177 = smul.addr %s174, 4
          %s178 = sadd.s32 %s176, %s177
          %s179 = smul.addr %s178, 4
          %s180 = scalar_lea.vmem %s0, %s179
          %s181 = smul.u32 4, %s19
        $region28: #{tpu_custom_call.1} parent=23 // pred_fallthru
          _
      $region24: #{tpu_custom_call.1} parent=5 // pred_fallthru
        _
      %p182 = scmp.le.s32.totalorder 1, %s12
      %p183 = scmp.lt.s32.totalorder %s12, 3
      %p184 = pnand %p182, %p183
      %p185 = pneg %p184
      // Predicated region
      $region29: #{tpu_custom_call.1} parent=5 // pred_check
        _
      $region30: #{tpu_custom_call.1} parent=5 // pred_check_branch
        %187 = sbr.rel (%p184) target = $region32
      $region31: #{tpu_custom_call.1} parent=5 // pred_region
        %s188 = ssub.s32 %s12, 1
        %s189 = smul.u32 4, %s21
        %p190 = scmp.lt.s32.totalorder %s22, 1
        %s191 = scalar_select %p190, %s22, 1
        %p192 = scmp.lt.s32.totalorder %s189, 3
        %s193 = scalar_select %p192, %s189, 3
        %s194 = smul.addr %s191, 4
        %s195 = sadd.s32 %s193, %s194
        %s196 = smul.addr %s195, 4
        %s197 = scalar_lea.vmem %s0, %s196
        %p198 = pneg %p52
        %p199 = pneg %p49
        %s200 = smul.u32 4, %s21
        %p201 = scmp.lt.s32.totalorder %s200, 3
        %s202 = scalar_select %p201, %s200, 3
        %s203 = smul.addr %s202, 4
        %s204 = scalar_lea.vmem %s1, %s203
        %p205 = pneg %p78
        %p206 = pneg %p75
        %s207 = smul.u32 4, %s21
        %p208 = scmp.lt.s32.totalorder %s207, 3
        %s209 = scalar_select %p208, %s207, 3
        %s210 = smul.addr %s209, 4
        %s211 = scalar_lea.vmem %s2, %s210
        %p212 = pneg %p104
        %p213 = pneg %p101
        %p214 = pneg %p132
        %p215 = pneg %p129
        %s216 = sand.u32 %s119, 1
        %s217 = scalar_lea.sflag [#allocation3], %s216
        %s218 = sand.u32 %s119, 1
        %s219 = smul.addr %s218, 16
        %s220 = scalar_lea.vmem [#allocation2], %s219
        %s221 = smul.u32 4, %s21
        %p222 = scmp.lt.s32.totalorder %s22, 1
        %s223 = scalar_select %p222, %s22, 1
        %p224 = scmp.lt.s32.totalorder %s221, 3
        %s225 = scalar_select %p224, %s221, 3
        %s226 = smul.addr %s223, 4
        %s227 = sadd.s32 %s225, %s226
        %s228 = smul.addr %s227, 4
        %s229 = scalar_lea.vmem %s0, %s228
        %s230 = smul.u32 4, %s21
        %s231 = smul.u32 4, %s21
        %p232 = scmp.lt.s32.totalorder %s231, 3
        %s233 = scalar_select %p232, %s231, 3
        %s234 = smul.addr %s233, 4
        %s235 = scalar_lea.vmem %s1, %s234
        %s236 = smul.u32 4, %s21
        %s237 = smul.u32 4, %s21
        %p238 = scmp.lt.s32.totalorder %s237, 3
        %s239 = scalar_select %p238, %s237, 3
        %s240 = smul.addr %s239, 4
        %s241 = scalar_lea.vmem %s2, %s240
        %s242 = smul.u32 4, %s21
        %s243 = smul.u32 4, %s21
        %v244 = vld [vmem:[%s229] sm:$0xf]
        %v245 = vld [vmem:[%s229 + $0x4] sm:$0xf]
        %v246 = vld [vmem:[%s229 + $0x8] sm:$0xf]
        %v247 = vld [vmem:[%s229 + $0xc] sm:$0xf]
        %vm248 = vcmask 1043456
        %v249 = vsel %vm248, %v244, 0.0
        %250 = vadd.xlane.f32.xlu0 %v249
        %v251 = vpop.xlane.xlu0 %250
        %v252 = vsel %vm248, %v245, 0.0
        %253 = vadd.xlane.f32.xlu0 %v252
        %v254 = vpop.xlane.xlu0 %253
        %v255 = vsel %vm248, %v246, 0.0
        %256 = vadd.xlane.f32.xlu0 %v255
        %v257 = vpop.xlane.xlu0 %256
        %v258 = vsel %vm248, %v247, 0.0
        %259 = vadd.xlane.f32.xlu0 %v258
        %v260 = vpop.xlane.xlu0 %259
        %v261 = vsel %vm248, %v251, 0.0
        %v262 = vrot.slane %v261, 4
        %v263 = vadd.f32 %v261, %v262
        %v264 = vrot.slane %v263, 2
        %v265 = vadd.f32 %v263, %v264
        %v266 = vrot.slane %v265, 1
        %v267 = vadd.f32 %v265, %v266
        %v268 = vsel %vm248, %v254, 0.0
        %v269 = vrot.slane %v268, 4
        %v270 = vadd.f32 %v268, %v269
        %v271 = vrot.slane %v270, 2
        %v272 = vadd.f32 %v270, %v271
        %v273 = vrot.slane %v272, 1
        %v274 = vadd.f32 %v272, %v273
        %v275 = vsel %vm248, %v257, 0.0
        %v276 = vrot.slane %v275, 4
        %v277 = vadd.f32 %v275, %v276
        %v278 = vrot.slane %v277, 2
        %v279 = vadd.f32 %v277, %v278
        %v280 = vrot.slane %v279, 1
        %v281 = vadd.f32 %v279, %v280
        %v282 = vsel %vm248, %v260, 0.0
        %v283 = vrot.slane %v282, 4
        %v284 = vadd.f32 %v282, %v283
        %v285 = vrot.slane %v284, 2
        %v286 = vadd.f32 %v284, %v285
        %v287 = vrot.slane %v286, 1
        %v288 = vadd.f32 %v286, %v287
        %v289 = vmul.f32 %v267, 0.001953125
        %v290 = vmul.f32 %v274, 0.001953125
        %v291 = vmul.f32 %v281, 0.001953125
        %v292 = vmul.f32 %v288, 0.001953125
        %v293 = vsub.f32 %v244, %v289
        %v294 = vsub.f32 %v245, %v290
        %v295 = vsub.f32 %v246, %v291
        %v296 = vsub.f32 %v247, %v292
        %v297 = vmul.f32 %v293, %v293
        %v298 = vmul.f32 %v294, %v294
        %v299 = vmul.f32 %v295, %v295
        %v300 = vmul.f32 %v296, %v296
        %v301 = vsel %vm248, %v297, 0.0
        %302 = vadd.xlane.f32.xlu0 %v301
        %v303 = vpop.xlane.xlu0 %302
        %v304 = vsel %vm248, %v298, 0.0
        %305 = vadd.xlane.f32.xlu0 %v304
        %v306 = vpop.xlane.xlu0 %305
        %v307 = vsel %vm248, %v299, 0.0
        %308 = vadd.xlane.f32.xlu0 %v307
        %v309 = vpop.xlane.xlu0 %308
        %v310 = vsel %vm248, %v300, 0.0
        %311 = vadd.xlane.f32.xlu0 %v310
        %v312 = vpop.xlane.xlu0 %311
        %v313 = vsel %vm248, %v303, 0.0
        %v314 = vrot.slane %v313, 4
        %v315 = vadd.f32 %v313, %v314
        %v316 = vrot.slane %v315, 2
        %v317 = vadd.f32 %v315, %v316
        %v318 = vrot.slane %v317, 1
        %v319 = vadd.f32 %v317, %v318
        %v320 = vsel %vm248, %v306, 0.0
        %v321 = vrot.slane %v320, 4
        %v322 = vadd.f32 %v320, %v321
        %v323 = vrot.slane %v322, 2
        %v324 = vadd.f32 %v322, %v323
        %v325 = vrot.slane %v324, 1
        %v326 = vadd.f32 %v324, %v325
        %v327 = vsel %vm248, %v309, 0.0
        %v328 = vrot.slane %v327, 4
        %v329 = vadd.f32 %v327, %v328
        %v330 = vrot.slane %v329, 2
        %v331 = vadd.f32 %v329, %v330
        %v332 = vrot.slane %v331, 1
        %v333 = vadd.f32 %v331, %v332
        %v334 = vsel %vm248, %v312, 0.0
        %v335 = vrot.slane %v334, 4
        %v336 = vadd.f32 %v334, %v335
        %v337 = vrot.slane %v336, 2
        %v338 = vadd.f32 %v336, %v337
        %v339 = vrot.slane %v338, 1
        %v340 = vadd.f32 %v338, %v339
        %v341 = vmul.f32 %v319, 0.0019569471
        %v342 = vmul.f32 %v326, 0.0019569471
        %v343 = vmul.f32 %v333, 0.0019569471
        %v344 = vmul.f32 %v340, 0.0019569471
        %v345 = vadd.f32 %v341, 1e-05
        %v346 = vadd.f32 %v342, 1e-05
        %v347 = vadd.f32 %v343, 1e-05
        %v348 = vadd.f32 %v344, 1e-05
        %v349 = vrsqrt.pop %v345
        %v350 = vrsqrt.pop %v346
        %v351 = vrsqrt.pop %v347
        %v352 = vrsqrt.pop %v348
        %v353 = vld [vmem:[%s235] sm:$0xf]
        %v354 = vld [vmem:[%s235 + $0x4] sm:$0xf]
        %v355 = vld [vmem:[%s235 + $0x8] sm:$0xf]
        %v356 = vld [vmem:[%s235 + $0xc] sm:$0xf]
        %v357 = vmul.f32 %v353, %v349
        %v358 = vmul.f32 %v354, %v350
        %v359 = vmul.f32 %v355, %v351
        %v360 = vmul.f32 %v356, %v352
        %v361 = vld [vmem:[%s241] sm:$0xf]
        %v362 = vld [vmem:[%s241 + $0x4] sm:$0xf]
        %v363 = vld [vmem:[%s241 + $0x8] sm:$0xf]
        %v364 = vld [vmem:[%s241 + $0xc] sm:$0xf]
        %v365 = vmul.f32 %v289, %v357
        %v366 = vmul.f32 %v290, %v358
        %v367 = vmul.f32 %v291, %v359
        %v368 = vmul.f32 %v292, %v360
        %v369 = vsub.f32 %v361, %v365
        %v370 = vsub.f32 %v362, %v366
        %v371 = vsub.f32 %v363, %v367
        %v372 = vsub.f32 %v364, %v368
        %374 = vset.pattern.permute.xlu0 0
        %375 = vperm.xlu0 %374, %v357
        %v376 = vpop.permute.xlu0 %375
        %379 = vset.pattern.permute.xlu0 0
        %380 = vperm.xlu0 %379, %v358
        %v381 = vpop.permute.xlu0 %380
        %384 = vset.pattern.permute.xlu0 0
        %385 = vperm.xlu0 %384, %v359
        %v386 = vpop.permute.xlu0 %385
        %389 = vset.pattern.permute.xlu0 0
        %390 = vperm.xlu0 %389, %v360
        %v391 = vpop.permute.xlu0 %390
        %v393 = vmul.f32 %v244, %v376
        %v394 = vmul.f32 %v245, %v381
        %v395 = vmul.f32 %v246, %v386
        %v396 = vmul.f32 %v247, %v391
        %398 = vset.pattern.permute.xlu0 0
        %399 = vperm.xlu0 %398, %v369
        %v400 = vpop.permute.xlu0 %399
        %403 = vset.pattern.permute.xlu0 0
        %404 = vperm.xlu0 %403, %v370
        %v405 = vpop.permute.xlu0 %404
        %408 = vset.pattern.permute.xlu0 0
        %409 = vperm.xlu0 %408, %v371
        %v410 = vpop.permute.xlu0 %409
        %413 = vset.pattern.permute.xlu0 0
        %414 = vperm.xlu0 %413, %v372
        %v415 = vpop.permute.xlu0 %414
        %v417 = vadd.f32 %v393, %v400
        %v418 = vadd.f32 %v394, %v405
        %v419 = vadd.f32 %v395, %v410
        %v420 = vadd.f32 %v396, %v415
        %421 = vst [vmem:[%s220] sm:$0xf] %v417
        %422 = vst [vmem:[%s220 + $0x4] sm:$0xf] %v418
        %423 = vst [vmem:[%s220 + $0x8] sm:$0xf] %v419
        %424 = vst [vmem:[%s220 + $0xc] sm:$0xf] %v420
        %s425 = sand.u32 %s119, 1
        %s426 = scalar_lea.sflag [#allocation3], %s425
        %s427 = sand.u32 %s119, 1
        %s428 = smul.addr %s427, 16
        %s429 = scalar_lea.vmem [#allocation2], %s428
        // Predicated region
        $region33: #{tpu_custom_call.1} parent=31 // pred_check
          %p430 = pneg %p129
        $region34: #{tpu_custom_call.1} parent=31 // pred_check_branch
          %432 = sbr.rel (%p430) target = $region36
        $region35: #{tpu_custom_call.1} parent=31 // pred_region
          %s433 = smul.u32 4, %s21
          %s435 = ssub.s32 256, 256
          %436 = vsyncadd %s426, %s435
          %s437 = smul.addr %s22, 4
          %s438 = sadd.s32 %s433, %s437
          %s439 = smul.addr %s438, 64
          %s440 = scalar_lea.hbm %s3, %s439
          %s441 = sshll.u32 %s429, 4
          %s442 = int_to_ptr.vmem [resolvable:$true] %s441
          %447 = dma.vmem_to_hbm [thread:$0]  %s442, 256, %s440, %s426, 64, 64, 4
        $region36: #{tpu_custom_call.1} parent=31 // pred_fallthru
          _
      $region32: #{tpu_custom_call.1} parent=5 // pred_fallthru
        _
      %p448 = scmp.le.s32.totalorder 2, %s12
      // Predicated region
      $region37: #{tpu_custom_call.1} parent=5 // pred_check
        %p449 = pneg %p448
      $region38: #{tpu_custom_call.1} parent=5 // pred_check_branch
        %451 = sbr.rel (%p449) target = $region40
      $region39: #{tpu_custom_call.1} parent=5 // pred_region
        %s452 = ssub.s32 %s12, 2
        // Predicated region
        $region41: #{tpu_custom_call.1} parent=39 // pred_check
          %p453 = pneg %p135
        $region42: #{tpu_custom_call.1} parent=39 // pred_check_branch
          %455 = sbr.rel (%p453) target = $region44
        $region43: #{tpu_custom_call.1} parent=39 // pred_region
          %s456 = sand.u32 %s120, 1
          %s457 = scalar_lea.sflag [#allocation3], %s456
          %s458 = sand.u32 %s120, 1
          %s459 = smul.addr %s458, 16
          %s460 = scalar_lea.vmem [#allocation2], %s459
          %461 = dma.done %s457, 256
        $region44: #{tpu_custom_call.1} parent=39 // pred_fallthru
          _
      $region40: #{tpu_custom_call.1} parent=5 // pred_fallthru
        _
    $region6: #{tpu_custom_call.1} parent=1 // loop_footer
      %s16 = sadd.s32 1, %s12
    $region7: #{tpu_custom_call.1} parent=1 // loop_footer_branch
      %11 = sbr.rel target = $region3
    $region8: #{tpu_custom_call.1} parent=1 // loop_exit
      _
    %462 = vsyncpa [#allocation3], 1
    %s463 = scalar_lea.sflag [#allocation3], 1
    %464 = vsyncpa %s463, 1

</llo_original>
